<compile_context>
chip_gen: v5e
topology: v5e:2x2
jax: 0.10.0
libtpu: 0.0.40
codegen_flags: <defaults>
</compile_context>

<pallas_src>
import functools

import jax
import jax.numpy as jnp
from jax import lax
from jax.experimental import pallas as pl
from jax.experimental.pallas import tpu as pltpu


# ------------------------------- configuration ------------------------------ #
SEQ_LEN = 8          # seq_len                  (rows -> sublanes, multiple of 8)
EMB = 32             # input_width == emb
HEADS = 2            # num_heads ("wide" attention: head_dim == EMB)
DEPTH = 2            # num_hidden_layers (transformer blocks)
FF = 4 * EMB         # former's ff_hidden_mult = 4
N_OUTPUT = 1
MAX_POOL = True
LAYERNORM = True
LN_EPS = 1e-5
OUT_PAD = 128        # lane-dense padded output width
OUT_ROWS = 8         # sublane-padded output rows

# layout of the packed "smalls" slab ([SMALLS_ROWS, 128], f32):
#   rows 0..SEQ_LEN-1                  : positional embedding (cols 0:EMB)
#   per layer l, base = SEQ_LEN + 7*l  : bu, ln1_g, ln1_b, b1(128 cols), b2, ln2_g, ln2_b
#   row SEQ_LEN + 7*DEPTH              : padded output bias (128 cols)
ROWS_PER_LAYER = 7
ROW_BOUT = SEQ_LEN + DEPTH * ROWS_PER_LAYER
SMALLS_ROWS = ((ROW_BOUT + 1 + 7) // 8) * 8          # -> 24 (sublane-aligned)


# --------------------------------- helpers ---------------------------------- #
def _layernorm_ref(x, gamma, beta):
    """torch.nn.LayerNorm over the last dim (biased variance, eps=1e-5)."""
    mu = jnp.mean(x, axis=-1, keepdims=True)
    var = jnp.mean(jnp.square(x - mu), axis=-1, keepdims=True)
    return (x - mu) * lax.rsqrt(var + LN_EPS) * gamma + beta


def _layernorm_onepass(x, gamma, beta):
    """One-pass LayerNorm: E[x] and E[x^2] are independent lane reductions."""
    mu = jnp.mean(x, axis=-1, keepdims=True)
    msq = jnp.mean(jnp.square(x), axis=-1, keepdims=True)
    var = msq - jnp.square(mu)
    return (x - mu) * lax.rsqrt(var + LN_EPS) * gamma + beta


# ------------------------------ fused kernel -------------------------------- #
def _fused_transformer_kernel(x_ref, wqkv_ref, wuw2_ref, w1out_ref, smalls_ref,
                              o_ref, *, depth, heads, emb, seq, max_pool,
                              layernorm):
    f32 = jnp.float32
    smalls = smalls_ref[...]                                # [24,128] single load
    x = x_ref[...] + smalls[0:seq, :emb]                    # + positional embedding

    for l in range(depth):                                  # static unroll, all VMEM
        base = seq + l * ROWS_PER_LAYER
        bu = smalls[base + 0:base + 1, :emb]
        ln1g = smalls[base + 1:base + 2, :emb]
        ln1b = smalls[base + 2:base + 3, :emb]
        b1 = smalls[base + 3:base + 4, :]                   # [1, FF]
        b2 = smalls[base + 4:base + 5, :emb]
        ln2g = smalls[base + 5:base + 6, :emb]
        ln2b = smalls[base + 6:base + 7, :emb]

        # ---- fused QKV projection (one matmul for q/k/v of all heads) -------
        # emb**-0.25 q/k scale already folded into wqkv columns at pack time.
        qkv = jnp.dot(x, wqkv_ref[l], preferred_element_type=f32)      # [T, 3*H*E]

        head_outs = []
        for h in range(heads):
            q = qkv[:, h * emb:(h + 1) * emb]                          # [T, E]
            k = qkv[:, (heads + h) * emb:(heads + h + 1) * emb]        # [T, E]
            v = qkv[:, (2 * heads + h) * emb:(2 * heads + h + 1) * emb]
            # scores = q @ k.T  (contract last dims; avoids explicit transpose)
            s = lax.dot_general(q, k, (((1,), (1,)), ((), ())),
                                preferred_element_type=f32)            # [T, T]
            s = s - jnp.max(s, axis=-1, keepdims=True)
            p = jnp.exp(s)
            # divide -> EUP approximate reciprocal (off the VALU chain)
            p = p * pl.reciprocal(jnp.sum(p, axis=-1, keepdims=True), approx=True)
            head_outs.append(jnp.dot(p, v, preferred_element_type=f32))  # [T, E]

        # ---- unifyheads: single concat + [T,H*E]@[H*E,E] matmul --------------
        wuw2 = wuw2_ref[l]                                   # [H*E + FF, E]
        o_cat = jnp.concatenate(head_outs, axis=-1)          # [T, H*E]
        att = jnp.dot(o_cat, wuw2[:heads * emb],
                      preferred_element_type=f32) + bu       # [T, E]

        x = att + x
        if layernorm:
            x = _layernorm_onepass(x, ln1g, ln1b)
        # TODO(synk): dropout -> identity (inference)

        # ---- feed-forward ----------------------------------------------------
        hmid = jnp.maximum(
            jnp.dot(x, w1out_ref[l], preferred_element_type=f32) + b1, 0.0)   # [T, FF]
        ff = jnp.dot(hmid, wuw2[heads * emb:],
                     preferred_element_type=f32) + b2                          # [T, E]
        x = ff + x
        if layernorm:
            x = _layernorm_onepass(x, ln2g, ln2b)
        # TODO(synk): dropout -> identity (inference)

    # ---- pooling over the sequence + output head -----------------------------
    if max_pool:
        pooled = jnp.max(x, axis=0, keepdims=True)           # [1, E]
    else:
        pooled = jnp.mean(x, axis=0, keepdims=True)
    bout = smalls[ROW_BOUT:ROW_BOUT + 1, :]                  # [1, OUT_PAD]
    y = jnp.dot(pooled, w1out_ref[depth], preferred_element_type=f32) + bout
    # single lane-dense, sublane-aligned HBM store
    o_ref[...] = jnp.broadcast_to(y, o_ref.shape)            # [OUT_ROWS, OUT_PAD]


# ------------------------------- wrapper ------------------------------------ #
def transformer_logs_forward(packed, sys_logs):
    """TransformerLogs.forward for the 2-D sys_logs case (batch of 1, squeezed)."""
    kernel = functools.partial(
        _fused_transformer_kernel, depth=DEPTH, heads=HEADS, emb=EMB,
        seq=SEQ_LEN, max_pool=MAX_POOL, layernorm=LAYERNORM)
    vmem = pl.BlockSpec(memory_space=pltpu.MemorySpace.VMEM)
    args = (sys_logs, packed["wqkv"], packed["wuw2"], packed["w1out"],
            packed["smalls"])
    out_padded = pl.pallas_call(
        kernel,
        out_shape=jax.ShapeDtypeStruct((OUT_ROWS, OUT_PAD), jnp.float32),
        in_specs=[vmem] * len(args),
        out_specs=vmem,
    )(*args)
    # net(x) is [1, n_output]; .squeeze(dim=0) -> [n_output]
    return out_padded[0, :N_OUTPUT]
    # TODO(synk): for many-config throughput, add a leading batch dim with
    # grid=(B,) and dimension_semantics=("parallel",) to use both v7x TCs.


# ------------------------------ parameters ----------------------------------- #
def init_params(key):
    ks = jax.random.split(key, 12)

    def lin_w(k, shape, fan_in):
        return jax.random.normal(k, shape, jnp.float32) / jnp.sqrt(float(fan_in))

    p = {}
    p["pos"] = jax.random.normal(ks[0], (SEQ_LEN, EMB), jnp.float32)      # nn.Embedding N(0,1)
    # attention weights, stacked over (layer, head) -> single leading axis
    p["wq"] = lin_w(ks[1], (DEPTH * HEADS, EMB, EMB), EMB)
    p["wk"] = lin_w(ks[2], (DEPTH * HEADS, EMB, EMB), EMB)
    p["wv"] = lin_w(ks[3], (DEPTH * HEADS, EMB, EMB), EMB)
    p["wu"] = lin_w(ks[4], (DEPTH * HEADS, EMB, EMB), HEADS * EMB)        # unifyheads, per-head slab
    p["bu"] = 0.01 * jax.random.normal(ks[5], (DEPTH, 1, EMB), jnp.float32)
    # layernorms (torch defaults: gamma=1, beta=0)
    p["ln1_g"] = jnp.ones((DEPTH, 1, EMB), jnp.float32)
    p["ln1_b"] = jnp.zeros((DEPTH, 1, EMB), jnp.float32)
    p["ln2_g"] = jnp.ones((DEPTH, 1, EMB), jnp.float32)
    p["ln2_b"] = jnp.zeros((DEPTH, 1, EMB), jnp.float32)
    # feed-forward
    p["w1"] = lin_w(ks[6], (DEPTH, EMB, FF), EMB)
    p["b1"] = 0.01 * jax.random.normal(ks[7], (DEPTH, 1, FF), jnp.float32)
    p["w2"] = lin_w(ks[8], (DEPTH, FF, EMB), FF)
    p["b2"] = 0.01 * jax.random.normal(ks[9], (DEPTH, 1, EMB), jnp.float32)
    # output head, lane-padded 1 -> 128 (padded columns are exactly zero)
    wout = lin_w(ks[10], (EMB, N_OUTPUT), EMB)
    bout = 0.01 * jax.random.normal(ks[11], (N_OUTPUT,), jnp.float32)
    p["wout_pad"] = jnp.zeros((EMB, OUT_PAD), jnp.float32).at[:, :N_OUTPUT].set(wout)
    p["bout_pad"] = jnp.zeros((1, OUT_PAD), jnp.float32).at[0, :N_OUTPUT].set(bout)
    return p


def pack_params(p):
    """One-time re-layout of the weights into 4 kernel slabs (done at init, not per call)."""
    scale = 1.0 / (float(EMB) ** 0.25)                       # former scales q and k each
    # fused QKV weight, columns [q_h0|q_h1|k_h0|k_h1|v_h0|v_h1], scale folded into q/k
    wqkv = jnp.stack([
        jnp.concatenate(
            [p["wq"][l * HEADS + h] * scale for h in range(HEADS)]
            + [p["wk"][l * HEADS + h] * scale for h in range(HEADS)]
            + [p["wv"][l * HEADS + h] for h in range(HEADS)], axis=1)
        for l in range(DEPTH)])                              # [DEPTH, EMB, 3*H*EMB]

    # unifyheads (row-concat of per-head slabs == concat-form Wu) stacked with W2
    wuw2 = jnp.stack([
        jnp.concatenate(
            [p["wu"][l * HEADS + h] for h in range(HEADS)] + [p["w2"][l]], axis=0)
        for l in range(DEPTH)])                              # [DEPTH, H*EMB + FF, EMB]

    # FF first layer per block + padded output head share the [EMB, 128] shape
    w1out = jnp.concatenate([p["w1"], p["wout_pad"][None]], axis=0)  # [DEPTH+1, EMB, FF]

    # all small vectors in one [24,128] slab (single DMA)
    smalls = jnp.zeros((SMALLS_ROWS, 128), jnp.float32)
    smalls = smalls.at[0:SEQ_LEN, :EMB].set(p["pos"])
    for l in range(DEPTH):
        base = SEQ_LEN + l * ROWS_PER_LAYER
        smalls = smalls.at[base + 0, :EMB].set(p["bu"][l, 0])
        smalls = smalls.at[base + 1, :EMB].set(p["ln1_g"][l, 0])
        smalls = smalls.at[base + 2, :EMB].set(p["ln1_b"][l, 0])
        smalls = smalls.at[base + 3, :FF].set(p["b1"][l, 0])
        smalls = smalls.at[base + 4, :EMB].set(p["b2"][l, 0])
        smalls = smalls.at[base + 5, :EMB].set(p["ln2_g"][l, 0])
        smalls = smalls.at[base + 6, :EMB].set(p["ln2_b"][l, 0])
    smalls = smalls.at[ROW_BOUT, :].set(p["bout_pad"][0])
    return {"wqkv": wqkv, "wuw2": wuw2, "w1out": w1out, "smalls": smalls}


# --------------------------- pure-JAX reference ------------------------------ #
def reference_forward(params, sys_logs):
    x = sys_logs + params["pos"]
    scale = 1.0 / (float(EMB) ** 0.25)
    for l in range(DEPTH):
        att = jnp.zeros_like(x)
        for h in range(HEADS):
            idx = l * HEADS + h
            q = (x @ params["wq"][idx]) * scale
            k = (x @ params["wk"][idx]) * scale
            v = x @ params["wv"][idx]
            s = q @ k.T
            pm = jax.nn.softmax(s, axis=-1)
            att = att + (pm @ v) @ params["wu"][idx]
        att = att + params["bu"][l]
        x = att + x
        if LAYERNORM:
            x = _layernorm_ref(x, params["ln1_g"][l], params["ln1_b"][l])
        hmid = jnp.maximum(x @ params["w1"][l] + params["b1"][l], 0.0)
        ff = hmid @ params["w2"][l] + params["b2"][l]
        x = ff + x
        if LAYERNORM:
            x = _layernorm_ref(x, params["ln2_g"][l], params["ln2_b"][l])
    pooled = (jnp.max(x, axis=0, keepdims=True) if MAX_POOL
              else jnp.mean(x, axis=0, keepdims=True))
    y = pooled @ params["wout_pad"][:, :N_OUTPUT] + params["bout_pad"][0, :N_OUTPUT]
    return y[0]                                          # .squeeze(dim=0) -> [n_output]


# ----------------------------------- main ------------------------------------ #
if __name__ == "__main__":
    key = jax.random.PRNGKey(0)
    k_params, k_data = jax.random.split(key)
    params = init_params(k_params)
    packed = pack_params(params)          # one-time re-layout, outside the jitted fwd
    # data['sys_logs'] : 2-D [seq_len, input_width]  (TransformerLogs unsqueezes to b=1)
    sys_logs = jax.random.normal(k_data, (SEQ_LEN, EMB), jnp.float32)

    fwd = jax.jit(transformer_logs_forward)
    out = jax.block_until_ready(fwd(packed, sys_logs))

    ref = reference_forward(params, sys_logs)
    assert out.shape == (N_OUTPUT,), out.shape
    # tolerance 2e-3: the kernel uses the EUP approximate reciprocal for the
    # softmax denominator (plus fused-weight reassociation); the reference uses
    # exact division.
    assert jnp.allclose(out, ref, atol=2e-3, rtol=2e-3), (out, ref)

    print("KERNEL_OK")
</pallas_src>

<mosaic_0001>
module attributes {stable_mosaic.version = 11 : i64} {
  func.func @_fused_transformer_kernel(%arg0: memref<8x32xf32, #tpu.memory_space<vmem>>, %arg1: memref<2x32x192xf32, #tpu.memory_space<vmem>>, %arg2: memref<2x192x32xf32, #tpu.memory_space<vmem>>, %arg3: memref<3x32x128xf32, #tpu.memory_space<vmem>>, %arg4: memref<24x128xf32, #tpu.memory_space<vmem>>, %arg5: memref<8x128xf32, #tpu.memory_space<vmem>>) attributes {dimension_semantics = [], scalar_prefetch = 0 : i64, scratch_operands = 0 : i64, tpu.core_type = #tpu.core_type<tc>} {
    %c0 = arith.constant 0 : index
    %c0_0 = arith.constant 0 : index
    %0 = vector.load %arg4[%c0, %c0_0] : memref<24x128xf32, #tpu.memory_space<vmem>>, vector<24x128xf32>
    %c0_1 = arith.constant 0 : index
    %c0_2 = arith.constant 0 : index
    %1 = vector.load %arg0[%c0_1, %c0_2] : memref<8x32xf32, #tpu.memory_space<vmem>>, vector<8x32xf32>
    %2 = vector.extract_strided_slice %0 {offsets = [0, 0], sizes = [8, 32], strides = [1, 1]} : vector<24x128xf32> to vector<8x32xf32>
    %3 = arith.addf %1, %2 : vector<8x32xf32>
    %4 = vector.extract_strided_slice %0 {offsets = [8, 0], sizes = [1, 32], strides = [1, 1]} : vector<24x128xf32> to vector<1x32xf32>
    %5 = vector.extract_strided_slice %0 {offsets = [9, 0], sizes = [1, 32], strides = [1, 1]} : vector<24x128xf32> to vector<1x32xf32>
    %6 = vector.extract_strided_slice %0 {offsets = [10, 0], sizes = [1, 32], strides = [1, 1]} : vector<24x128xf32> to vector<1x32xf32>
    %7 = vector.extract_strided_slice %0 {offsets = [11, 0], sizes = [1, 128], strides = [1, 1]} : vector<24x128xf32> to vector<1x128xf32>
    %8 = vector.extract_strided_slice %0 {offsets = [12, 0], sizes = [1, 32], strides = [1, 1]} : vector<24x128xf32> to vector<1x32xf32>
    %9 = vector.extract_strided_slice %0 {offsets = [13, 0], sizes = [1, 32], strides = [1, 1]} : vector<24x128xf32> to vector<1x32xf32>
    %10 = vector.extract_strided_slice %0 {offsets = [14, 0], sizes = [1, 32], strides = [1, 1]} : vector<24x128xf32> to vector<1x32xf32>
    %c0_3 = arith.constant 0 : index
    %c0_4 = arith.constant 0 : index
    %c0_5 = arith.constant 0 : index
    %11 = vector.load %arg1[%c0_3, %c0_4, %c0_5] : memref<2x32x192xf32, #tpu.memory_space<vmem>>, vector<1x32x192xf32>
    %12 = vector.shape_cast %11 : vector<1x32x192xf32> to vector<32x192xf32>
    %cst = arith.constant dense<0.000000e+00> : vector<8x192xf32>
    %13 = tpu.matmul %3, %12, %cst {dimension_numbers = #tpu.dot_dimension_numbers<[1], [0], [0], [1], [0, 0, 1, 1], [], []>} : vector<8x32xf32>, vector<32x192xf32>, vector<8x192xf32> -> vector<8x192xf32>
    %14 = vector.extract_strided_slice %13 {offsets = [0, 0], sizes = [8, 32], strides = [1, 1]} : vector<8x192xf32> to vector<8x32xf32>
    %15 = vector.extract_strided_slice %13 {offsets = [0, 64], sizes = [8, 32], strides = [1, 1]} : vector<8x192xf32> to vector<8x32xf32>
    %16 = vector.extract_strided_slice %13 {offsets = [0, 128], sizes = [8, 32], strides = [1, 1]} : vector<8x192xf32> to vector<8x32xf32>
    %cst_6 = arith.constant dense<0.000000e+00> : vector<8x8xf32>
    %17 = tpu.matmul %14, %15, %cst_6 {dimension_numbers = #tpu.dot_dimension_numbers<[1], [1], [0], [0], [0, 0, 1, 0], [], []>} : vector<8x32xf32>, vector<8x32xf32>, vector<8x8xf32> -> vector<8x8xf32>
    %cst_7 = arith.constant dense<0xFF800000> : vector<8xf32>
    %18 = vector.multi_reduction <maximumf>, %17, %cst_7 [1] : vector<8x8xf32> to vector<8xf32>
    %19 = vector.shape_cast %18 : vector<8xf32> to vector<8x1xf32>
    %20 = vector.broadcast %19 : vector<8x1xf32> to vector<8x8xf32>
    %21 = arith.subf %17, %20 : vector<8x8xf32>
    %22 = math.exp %21 : vector<8x8xf32>
    %cst_8 = arith.constant dense<0.000000e+00> : vector<8xf32>
    %23 = vector.multi_reduction <add>, %22, %cst_8 [1] : vector<8x8xf32> to vector<8xf32>
    %24 = vector.shape_cast %23 : vector<8xf32> to vector<8x1xf32>
    %25 = tpu.reciprocal %24 {approx = true} : vector<8x1xf32> -> vector<8x1xf32>
    %26 = vector.broadcast %25 : vector<8x1xf32> to vector<8x8xf32>
    %27 = arith.mulf %22, %26 : vector<8x8xf32>
    %cst_9 = arith.constant dense<0.000000e+00> : vector<8x32xf32>
    %28 = tpu.matmul %27, %16, %cst_9 {dimension_numbers = #tpu.dot_dimension_numbers<[1], [0], [0], [1], [0, 0, 1, 1], [], []>} : vector<8x8xf32>, vector<8x32xf32>, vector<8x32xf32> -> vector<8x32xf32>
    %29 = vector.extract_strided_slice %13 {offsets = [0, 32], sizes = [8, 32], strides = [1, 1]} : vector<8x192xf32> to vector<8x32xf32>
    %30 = vector.extract_strided_slice %13 {offsets = [0, 96], sizes = [8, 32], strides = [1, 1]} : vector<8x192xf32> to vector<8x32xf32>
    %31 = vector.extract_strided_slice %13 {offsets = [0, 160], sizes = [8, 32], strides = [1, 1]} : vector<8x192xf32> to vector<8x32xf32>
    %cst_10 = arith.constant dense<0.000000e+00> : vector<8x8xf32>
    %32 = tpu.matmul %29, %30, %cst_10 {dimension_numbers = #tpu.dot_dimension_numbers<[1], [1], [0], [0], [0, 0, 1, 0], [], []>} : vector<8x32xf32>, vector<8x32xf32>, vector<8x8xf32> -> vector<8x8xf32>
    %cst_11 = arith.constant dense<0xFF800000> : vector<8xf32>
    %33 = vector.multi_reduction <maximumf>, %32, %cst_11 [1] : vector<8x8xf32> to vector<8xf32>
    %34 = vector.shape_cast %33 : vector<8xf32> to vector<8x1xf32>
    %35 = vector.broadcast %34 : vector<8x1xf32> to vector<8x8xf32>
    %36 = arith.subf %32, %35 : vector<8x8xf32>
    %37 = math.exp %36 : vector<8x8xf32>
    %cst_12 = arith.constant dense<0.000000e+00> : vector<8xf32>
    %38 = vector.multi_reduction <add>, %37, %cst_12 [1] : vector<8x8xf32> to vector<8xf32>
    %39 = vector.shape_cast %38 : vector<8xf32> to vector<8x1xf32>
    %40 = tpu.reciprocal %39 {approx = true} : vector<8x1xf32> -> vector<8x1xf32>
    %41 = vector.broadcast %40 : vector<8x1xf32> to vector<8x8xf32>
    %42 = arith.mulf %37, %41 : vector<8x8xf32>
    %cst_13 = arith.constant dense<0.000000e+00> : vector<8x32xf32>
    %43 = tpu.matmul %42, %31, %cst_13 {dimension_numbers = #tpu.dot_dimension_numbers<[1], [0], [0], [1], [0, 0, 1, 1], [], []>} : vector<8x8xf32>, vector<8x32xf32>, vector<8x32xf32> -> vector<8x32xf32>
    %c0_14 = arith.constant 0 : index
    %c0_15 = arith.constant 0 : index
    %c0_16 = arith.constant 0 : index
    %44 = vector.load %arg2[%c0_14, %c0_15, %c0_16] : memref<2x192x32xf32, #tpu.memory_space<vmem>>, vector<1x192x32xf32>
    %45 = vector.shape_cast %44 : vector<1x192x32xf32> to vector<192x32xf32>
    %46 = tpu.concatenate %28, %43 in 1 : vector<8x32xf32>, vector<8x32xf32> -> vector<8x64xf32>
    %47 = vector.extract_strided_slice %45 {offsets = [0, 0], sizes = [64, 32], strides = [1, 1]} : vector<192x32xf32> to vector<64x32xf32>
    %cst_17 = arith.constant dense<0.000000e+00> : vector<8x32xf32>
    %48 = tpu.matmul %46, %47, %cst_17 {dimension_numbers = #tpu.dot_dimension_numbers<[1], [0], [0], [1], [0, 0, 1, 1], [], []>} : vector<8x64xf32>, vector<64x32xf32>, vector<8x32xf32> -> vector<8x32xf32>
    %49 = vector.broadcast %4 : vector<1x32xf32> to vector<8x32xf32>
    %50 = arith.addf %48, %49 : vector<8x32xf32>
    %51 = arith.addf %50, %3 : vector<8x32xf32>
    %cst_18 = arith.constant dense<0.000000e+00> : vector<8xf32>
    %52 = vector.multi_reduction <add>, %51, %cst_18 [1] : vector<8x32xf32> to vector<8xf32>
    %53 = vector.shape_cast %52 : vector<8xf32> to vector<8x1xf32>
    %cst_19 = arith.constant 3.200000e+01 : f32
    %54 = vector.broadcast %cst_19 : f32 to vector<8x1xf32>
    %55 = arith.divf %53, %54 : vector<8x1xf32>
    %56 = arith.mulf %51, %51 : vector<8x32xf32>
    %cst_20 = arith.constant dense<0.000000e+00> : vector<8xf32>
    %57 = vector.multi_reduction <add>, %56, %cst_20 [1] : vector<8x32xf32> to vector<8xf32>
    %58 = vector.shape_cast %57 : vector<8xf32> to vector<8x1xf32>
    %cst_21 = arith.constant 3.200000e+01 : f32
    %59 = vector.broadcast %cst_21 : f32 to vector<8x1xf32>
    %60 = arith.divf %58, %59 : vector<8x1xf32>
    %61 = arith.mulf %55, %55 : vector<8x1xf32>
    %62 = arith.subf %60, %61 : vector<8x1xf32>
    %63 = vector.broadcast %55 : vector<8x1xf32> to vector<8x32xf32>
    %64 = arith.subf %51, %63 : vector<8x32xf32>
    %cst_22 = arith.constant 9.99999974E-6 : f32
    %65 = vector.broadcast %cst_22 : f32 to vector<8x1xf32>
    %66 = arith.addf %62, %65 : vector<8x1xf32>
    %67 = math.rsqrt %66 : vector<8x1xf32>
    %68 = vector.broadcast %67 : vector<8x1xf32> to vector<8x32xf32>
    %69 = arith.mulf %64, %68 : vector<8x32xf32>
    %70 = vector.broadcast %5 : vector<1x32xf32> to vector<8x32xf32>
    %71 = arith.mulf %69, %70 : vector<8x32xf32>
    %72 = vector.broadcast %6 : vector<1x32xf32> to vector<8x32xf32>
    %73 = arith.addf %71, %72 : vector<8x32xf32>
    %c0_23 = arith.constant 0 : index
    %c0_24 = arith.constant 0 : index
    %c0_25 = arith.constant 0 : index
    %74 = vector.load %arg3[%c0_23, %c0_24, %c0_25] : memref<3x32x128xf32, #tpu.memory_space<vmem>>, vector<1x32x128xf32>
    %75 = vector.shape_cast %74 : vector<1x32x128xf32> to vector<32x128xf32>
    %cst_26 = arith.constant dense<0.000000e+00> : vector<8x128xf32>
    %76 = tpu.matmul %73, %75, %cst_26 {dimension_numbers = #tpu.dot_dimension_numbers<[1], [0], [0], [1], [0, 0, 1, 1], [], []>} : vector<8x32xf32>, vector<32x128xf32>, vector<8x128xf32> -> vector<8x128xf32>
    %77 = vector.broadcast %7 : vector<1x128xf32> to vector<8x128xf32>
    %78 = arith.addf %76, %77 : vector<8x128xf32>
    %cst_27 = arith.constant 0.000000e+00 : f32
    %79 = vector.broadcast %cst_27 : f32 to vector<8x128xf32>
    %80 = arith.maximumf %78, %79 : vector<8x128xf32>
    %81 = vector.extract_strided_slice %45 {offsets = [64, 0], sizes = [128, 32], strides = [1, 1]} : vector<192x32xf32> to vector<128x32xf32>
    %cst_28 = arith.constant dense<0.000000e+00> : vector<8x32xf32>
    %82 = tpu.matmul %80, %81, %cst_28 {dimension_numbers = #tpu.dot_dimension_numbers<[1], [0], [0], [1], [0, 0, 1, 1], [], []>} : vector<8x128xf32>, vector<128x32xf32>, vector<8x32xf32> -> vector<8x32xf32>
    %83 = vector.broadcast %8 : vector<1x32xf32> to vector<8x32xf32>
    %84 = arith.addf %82, %83 : vector<8x32xf32>
    %85 = arith.addf %84, %73 : vector<8x32xf32>
    %cst_29 = arith.constant dense<0.000000e+00> : vector<8xf32>
    %86 = vector.multi_reduction <add>, %85, %cst_29 [1] : vector<8x32xf32> to vector<8xf32>
    %87 = vector.shape_cast %86 : vector<8xf32> to vector<8x1xf32>
    %cst_30 = arith.constant 3.200000e+01 : f32
    %88 = vector.broadcast %cst_30 : f32 to vector<8x1xf32>
    %89 = arith.divf %87, %88 : vector<8x1xf32>
    %90 = arith.mulf %85, %85 : vector<8x32xf32>
    %cst_31 = arith.constant dense<0.000000e+00> : vector<8xf32>
    %91 = vector.multi_reduction <add>, %90, %cst_31 [1] : vector<8x32xf32> to vector<8xf32>
    %92 = vector.shape_cast %91 : vector<8xf32> to vector<8x1xf32>
    %cst_32 = arith.constant 3.200000e+01 : f32
    %93 = vector.broadcast %cst_32 : f32 to vector<8x1xf32>
    %94 = arith.divf %92, %93 : vector<8x1xf32>
    %95 = arith.mulf %89, %89 : vector<8x1xf32>
    %96 = arith.subf %94, %95 : vector<8x1xf32>
    %97 = vector.broadcast %89 : vector<8x1xf32> to vector<8x32xf32>
    %98 = arith.subf %85, %97 : vector<8x32xf32>
    %cst_33 = arith.constant 9.99999974E-6 : f32
    %99 = vector.broadcast %cst_33 : f32 to vector<8x1xf32>
    %100 = arith.addf %96, %99 : vector<8x1xf32>
    %101 = math.rsqrt %100 : vector<8x1xf32>
    %102 = vector.broadcast %101 : vector<8x1xf32> to vector<8x32xf32>
    %103 = arith.mulf %98, %102 : vector<8x32xf32>
    %104 = vector.broadcast %9 : vector<1x32xf32> to vector<8x32xf32>
    %105 = arith.mulf %103, %104 : vector<8x32xf32>
    %106 = vector.broadcast %10 : vector<1x32xf32> to vector<8x32xf32>
    %107 = arith.addf %105, %106 : vector<8x32xf32>
    %108 = vector.extract_strided_slice %0 {offsets = [15, 0], sizes = [1, 32], strides = [1, 1]} : vector<24x128xf32> to vector<1x32xf32>
    %109 = vector.extract_strided_slice %0 {offsets = [16, 0], sizes = [1, 32], strides = [1, 1]} : vector<24x128xf32> to vector<1x32xf32>
    %110 = vector.extract_strided_slice %0 {offsets = [17, 0], sizes = [1, 32], strides = [1, 1]} : vector<24x128xf32> to vector<1x32xf32>
    %111 = vector.extract_strided_slice %0 {offsets = [18, 0], sizes = [1, 128], strides = [1, 1]} : vector<24x128xf32> to vector<1x128xf32>
    %112 = vector.extract_strided_slice %0 {offsets = [19, 0], sizes = [1, 32], strides = [1, 1]} : vector<24x128xf32> to vector<1x32xf32>
    %113 = vector.extract_strided_slice %0 {offsets = [20, 0], sizes = [1, 32], strides = [1, 1]} : vector<24x128xf32> to vector<1x32xf32>
    %114 = vector.extract_strided_slice %0 {offsets = [21, 0], sizes = [1, 32], strides = [1, 1]} : vector<24x128xf32> to vector<1x32xf32>
    %c1 = arith.constant 1 : index
    %c0_34 = arith.constant 0 : index
    %c0_35 = arith.constant 0 : index
    %115 = vector.load %arg1[%c1, %c0_34, %c0_35] : memref<2x32x192xf32, #tpu.memory_space<vmem>>, vector<1x32x192xf32>
    %116 = vector.shape_cast %115 : vector<1x32x192xf32> to vector<32x192xf32>
    %cst_36 = arith.constant dense<0.000000e+00> : vector<8x192xf32>
    %117 = tpu.matmul %107, %116, %cst_36 {dimension_numbers = #tpu.dot_dimension_numbers<[1], [0], [0], [1], [0, 0, 1, 1], [], []>} : vector<8x32xf32>, vector<32x192xf32>, vector<8x192xf32> -> vector<8x192xf32>
    %118 = vector.extract_strided_slice %117 {offsets = [0, 0], sizes = [8, 32], strides = [1, 1]} : vector<8x192xf32> to vector<8x32xf32>
    %119 = vector.extract_strided_slice %117 {offsets = [0, 64], sizes = [8, 32], strides = [1, 1]} : vector<8x192xf32> to vector<8x32xf32>
    %120 = vector.extract_strided_slice %117 {offsets = [0, 128], sizes = [8, 32], strides = [1, 1]} : vector<8x192xf32> to vector<8x32xf32>
    %cst_37 = arith.constant dense<0.000000e+00> : vector<8x8xf32>
    %121 = tpu.matmul %118, %119, %cst_37 {dimension_numbers = #tpu.dot_dimension_numbers<[1], [1], [0], [0], [0, 0, 1, 0], [], []>} : vector<8x32xf32>, vector<8x32xf32>, vector<8x8xf32> -> vector<8x8xf32>
    %cst_38 = arith.constant dense<0xFF800000> : vector<8xf32>
    %122 = vector.multi_reduction <maximumf>, %121, %cst_38 [1] : vector<8x8xf32> to vector<8xf32>
    %123 = vector.shape_cast %122 : vector<8xf32> to vector<8x1xf32>
    %124 = vector.broadcast %123 : vector<8x1xf32> to vector<8x8xf32>
    %125 = arith.subf %121, %124 : vector<8x8xf32>
    %126 = math.exp %125 : vector<8x8xf32>
    %cst_39 = arith.constant dense<0.000000e+00> : vector<8xf32>
    %127 = vector.multi_reduction <add>, %126, %cst_39 [1] : vector<8x8xf32> to vector<8xf32>
    %128 = vector.shape_cast %127 : vector<8xf32> to vector<8x1xf32>
    %129 = tpu.reciprocal %128 {approx = true} : vector<8x1xf32> -> vector<8x1xf32>
    %130 = vector.broadcast %129 : vector<8x1xf32> to vector<8x8xf32>
    %131 = arith.mulf %126, %130 : vector<8x8xf32>
    %cst_40 = arith.constant dense<0.000000e+00> : vector<8x32xf32>
    %132 = tpu.matmul %131, %120, %cst_40 {dimension_numbers = #tpu.dot_dimension_numbers<[1], [0], [0], [1], [0, 0, 1, 1], [], []>} : vector<8x8xf32>, vector<8x32xf32>, vector<8x32xf32> -> vector<8x32xf32>
    %133 = vector.extract_strided_slice %117 {offsets = [0, 32], sizes = [8, 32], strides = [1, 1]} : vector<8x192xf32> to vector<8x32xf32>
    %134 = vector.extract_strided_slice %117 {offsets = [0, 96], sizes = [8, 32], strides = [1, 1]} : vector<8x192xf32> to vector<8x32xf32>
    %135 = vector.extract_strided_slice %117 {offsets = [0, 160], sizes = [8, 32], strides = [1, 1]} : vector<8x192xf32> to vector<8x32xf32>
    %cst_41 = arith.constant dense<0.000000e+00> : vector<8x8xf32>
    %136 = tpu.matmul %133, %134, %cst_41 {dimension_numbers = #tpu.dot_dimension_numbers<[1], [1], [0], [0], [0, 0, 1, 0], [], []>} : vector<8x32xf32>, vector<8x32xf32>, vector<8x8xf32> -> vector<8x8xf32>
    %cst_42 = arith.constant dense<0xFF800000> : vector<8xf32>
    %137 = vector.multi_reduction <maximumf>, %136, %cst_42 [1] : vector<8x8xf32> to vector<8xf32>
    %138 = vector.shape_cast %137 : vector<8xf32> to vector<8x1xf32>
    %139 = vector.broadcast %138 : vector<8x1xf32> to vector<8x8xf32>
    %140 = arith.subf %136, %139 : vector<8x8xf32>
    %141 = math.exp %140 : vector<8x8xf32>
    %cst_43 = arith.constant dense<0.000000e+00> : vector<8xf32>
    %142 = vector.multi_reduction <add>, %141, %cst_43 [1] : vector<8x8xf32> to vector<8xf32>
    %143 = vector.shape_cast %142 : vector<8xf32> to vector<8x1xf32>
    %144 = tpu.reciprocal %143 {approx = true} : vector<8x1xf32> -> vector<8x1xf32>
    %145 = vector.broadcast %144 : vector<8x1xf32> to vector<8x8xf32>
    %146 = arith.mulf %141, %145 : vector<8x8xf32>
    %cst_44 = arith.constant dense<0.000000e+00> : vector<8x32xf32>
    %147 = tpu.matmul %146, %135, %cst_44 {dimension_numbers = #tpu.dot_dimension_numbers<[1], [0], [0], [1], [0, 0, 1, 1], [], []>} : vector<8x8xf32>, vector<8x32xf32>, vector<8x32xf32> -> vector<8x32xf32>
    %c1_45 = arith.constant 1 : index
    %c0_46 = arith.constant 0 : index
    %c0_47 = arith.constant 0 : index
    %148 = vector.load %arg2[%c1_45, %c0_46, %c0_47] : memref<2x192x32xf32, #tpu.memory_space<vmem>>, vector<1x192x32xf32>
    %149 = vector.shape_cast %148 : vector<1x192x32xf32> to vector<192x32xf32>
    %150 = tpu.concatenate %132, %147 in 1 : vector<8x32xf32>, vector<8x32xf32> -> vector<8x64xf32>
    %151 = vector.extract_strided_slice %149 {offsets = [0, 0], sizes = [64, 32], strides = [1, 1]} : vector<192x32xf32> to vector<64x32xf32>
    %cst_48 = arith.constant dense<0.000000e+00> : vector<8x32xf32>
    %152 = tpu.matmul %150, %151, %cst_48 {dimension_numbers = #tpu.dot_dimension_numbers<[1], [0], [0], [1], [0, 0, 1, 1], [], []>} : vector<8x64xf32>, vector<64x32xf32>, vector<8x32xf32> -> vector<8x32xf32>
    %153 = vector.broadcast %108 : vector<1x32xf32> to vector<8x32xf32>
    %154 = arith.addf %152, %153 : vector<8x32xf32>
    %155 = arith.addf %154, %107 : vector<8x32xf32>
    %cst_49 = arith.constant dense<0.000000e+00> : vector<8xf32>
    %156 = vector.multi_reduction <add>, %155, %cst_49 [1] : vector<8x32xf32> to vector<8xf32>
    %157 = vector.shape_cast %156 : vector<8xf32> to vector<8x1xf32>
    %cst_50 = arith.constant 3.200000e+01 : f32
    %158 = vector.broadcast %cst_50 : f32 to vector<8x1xf32>
    %159 = arith.divf %157, %158 : vector<8x1xf32>
    %160 = arith.mulf %155, %155 : vector<8x32xf32>
    %cst_51 = arith.constant dense<0.000000e+00> : vector<8xf32>
    %161 = vector.multi_reduction <add>, %160, %cst_51 [1] : vector<8x32xf32> to vector<8xf32>
    %162 = vector.shape_cast %161 : vector<8xf32> to vector<8x1xf32>
    %cst_52 = arith.constant 3.200000e+01 : f32
    %163 = vector.broadcast %cst_52 : f32 to vector<8x1xf32>
    %164 = arith.divf %162, %163 : vector<8x1xf32>
    %165 = arith.mulf %159, %159 : vector<8x1xf32>
    %166 = arith.subf %164, %165 : vector<8x1xf32>
    %167 = vector.broadcast %159 : vector<8x1xf32> to vector<8x32xf32>
    %168 = arith.subf %155, %167 : vector<8x32xf32>
    %cst_53 = arith.constant 9.99999974E-6 : f32
    %169 = vector.broadcast %cst_53 : f32 to vector<8x1xf32>
    %170 = arith.addf %166, %169 : vector<8x1xf32>
    %171 = math.rsqrt %170 : vector<8x1xf32>
    %172 = vector.broadcast %171 : vector<8x1xf32> to vector<8x32xf32>
    %173 = arith.mulf %168, %172 : vector<8x32xf32>
    %174 = vector.broadcast %109 : vector<1x32xf32> to vector<8x32xf32>
    %175 = arith.mulf %173, %174 : vector<8x32xf32>
    %176 = vector.broadcast %110 : vector<1x32xf32> to vector<8x32xf32>
    %177 = arith.addf %175, %176 : vector<8x32xf32>
    %c1_54 = arith.constant 1 : index
    %c0_55 = arith.constant 0 : index
    %c0_56 = arith.constant 0 : index
    %178 = vector.load %arg3[%c1_54, %c0_55, %c0_56] : memref<3x32x128xf32, #tpu.memory_space<vmem>>, vector<1x32x128xf32>
    %179 = vector.shape_cast %178 : vector<1x32x128xf32> to vector<32x128xf32>
    %cst_57 = arith.constant dense<0.000000e+00> : vector<8x128xf32>
    %180 = tpu.matmul %177, %179, %cst_57 {dimension_numbers = #tpu.dot_dimension_numbers<[1], [0], [0], [1], [0, 0, 1, 1], [], []>} : vector<8x32xf32>, vector<32x128xf32>, vector<8x128xf32> -> vector<8x128xf32>
    %181 = vector.broadcast %111 : vector<1x128xf32> to vector<8x128xf32>
    %182 = arith.addf %180, %181 : vector<8x128xf32>
    %cst_58 = arith.constant 0.000000e+00 : f32
    %183 = vector.broadcast %cst_58 : f32 to vector<8x128xf32>
    %184 = arith.maximumf %182, %183 : vector<8x128xf32>
    %185 = vector.extract_strided_slice %149 {offsets = [64, 0], sizes = [128, 32], strides = [1, 1]} : vector<192x32xf32> to vector<128x32xf32>
    %cst_59 = arith.constant dense<0.000000e+00> : vector<8x32xf32>
    %186 = tpu.matmul %184, %185, %cst_59 {dimension_numbers = #tpu.dot_dimension_numbers<[1], [0], [0], [1], [0, 0, 1, 1], [], []>} : vector<8x128xf32>, vector<128x32xf32>, vector<8x32xf32> -> vector<8x32xf32>
    %187 = vector.broadcast %112 : vector<1x32xf32> to vector<8x32xf32>
    %188 = arith.addf %186, %187 : vector<8x32xf32>
    %189 = arith.addf %188, %177 : vector<8x32xf32>
    %cst_60 = arith.constant dense<0.000000e+00> : vector<8xf32>
    %190 = vector.multi_reduction <add>, %189, %cst_60 [1] : vector<8x32xf32> to vector<8xf32>
    %191 = vector.shape_cast %190 : vector<8xf32> to vector<8x1xf32>
    %cst_61 = arith.constant 3.200000e+01 : f32
    %192 = vector.broadcast %cst_61 : f32 to vector<8x1xf32>
    %193 = arith.divf %191, %192 : vector<8x1xf32>
    %194 = arith.mulf %189, %189 : vector<8x32xf32>
    %cst_62 = arith.constant dense<0.000000e+00> : vector<8xf32>
    %195 = vector.multi_reduction <add>, %194, %cst_62 [1] : vector<8x32xf32> to vector<8xf32>
    %196 = vector.shape_cast %195 : vector<8xf32> to vector<8x1xf32>
    %cst_63 = arith.constant 3.200000e+01 : f32
    %197 = vector.broadcast %cst_63 : f32 to vector<8x1xf32>
    %198 = arith.divf %196, %197 : vector<8x1xf32>
    %199 = arith.mulf %193, %193 : vector<8x1xf32>
    %200 = arith.subf %198, %199 : vector<8x1xf32>
    %201 = vector.broadcast %193 : vector<8x1xf32> to vector<8x32xf32>
    %202 = arith.subf %189, %201 : vector<8x32xf32>
    %cst_64 = arith.constant 9.99999974E-6 : f32
    %203 = vector.broadcast %cst_64 : f32 to vector<8x1xf32>
    %204 = arith.addf %200, %203 : vector<8x1xf32>
    %205 = math.rsqrt %204 : vector<8x1xf32>
    %206 = vector.broadcast %205 : vector<8x1xf32> to vector<8x32xf32>
    %207 = arith.mulf %202, %206 : vector<8x32xf32>
    %208 = vector.broadcast %113 : vector<1x32xf32> to vector<8x32xf32>
    %209 = arith.mulf %207, %208 : vector<8x32xf32>
    %210 = vector.broadcast %114 : vector<1x32xf32> to vector<8x32xf32>
    %211 = arith.addf %209, %210 : vector<8x32xf32>
    %cst_65 = arith.constant dense<0xFF800000> : vector<32xf32>
    %212 = vector.multi_reduction <maximumf>, %211, %cst_65 [0] : vector<8x32xf32> to vector<32xf32>
    %213 = vector.shape_cast %212 : vector<32xf32> to vector<1x32xf32>
    %214 = vector.extract_strided_slice %0 {offsets = [22, 0], sizes = [1, 128], strides = [1, 1]} : vector<24x128xf32> to vector<1x128xf32>
    %c2 = arith.constant 2 : index
    %c0_66 = arith.constant 0 : index
    %c0_67 = arith.constant 0 : index
    %215 = vector.load %arg3[%c2, %c0_66, %c0_67] : memref<3x32x128xf32, #tpu.memory_space<vmem>>, vector<1x32x128xf32>
    %216 = vector.shape_cast %215 : vector<1x32x128xf32> to vector<32x128xf32>
    %cst_68 = arith.constant dense<0.000000e+00> : vector<1x128xf32>
    %217 = tpu.matmul %213, %216, %cst_68 {dimension_numbers = #tpu.dot_dimension_numbers<[1], [0], [0], [1], [0, 0, 1, 1], [], []>} : vector<1x32xf32>, vector<32x128xf32>, vector<1x128xf32> -> vector<1x128xf32>
    %218 = arith.addf %217, %214 : vector<1x128xf32>
    %219 = vector.shape_cast %218 : vector<1x128xf32> to vector<1x128xf32>
    %220 = vector.broadcast %219 : vector<1x128xf32> to vector<8x128xf32>
    %c0_69 = arith.constant 0 : index
    %c0_70 = arith.constant 0 : index
    %221 = vector.load %arg5[%c0_69, %c0_70] : memref<8x128xf32, #tpu.memory_space<vmem>>, vector<8x128xf32>
    tpu.vector_store %arg5[%c0_69, %c0_70], %220 {strides = array<i32>} : memref<8x128xf32, #tpu.memory_space<vmem>>, vector<8x128xf32>,
    return
  }
}

</mosaic_0001>

<llo_original>
// kernel: transformer_logs_forward.1
$region0: #{transformer_logs_forward.1}
  #allocation0 [shape = 'u32[]', space=smem, size = 0x4, offset = 0x4, fixed_abs, tag = 'smem constant byte address 0x4 - core index']
  #allocation1 [shape = 'u32[72,128]{1,0:T(1,128)}', space=vmem, size = 0x9000, scoped, tag = 'internal scratch']
  %s0 = inlined_call_operand.vmem [shape: f32[8,32], index: 0, kind: input, shape index: {}]
  %s1 = inlined_call_operand.vmem [shape: f32[2,32,192], index: 1, kind: input, shape index: {}]
  %s2 = inlined_call_operand.vmem [shape: f32[2,192,32], index: 2, kind: input, shape index: {}]
  %s3 = inlined_call_operand.vmem [shape: f32[3,32,128], index: 3, kind: input, shape index: {}]
  %s4 = inlined_call_operand.vmem [shape: f32[24,128], index: 4, kind: input, shape index: {}]
  %s5 = inlined_call_operand.vmem [shape: f32[8,128], index: 5, kind: output, shape index: {}]
  %s6 = sld [smem:[#allocation0]]
  $region30: #{transformer_logs_forward.1} parent=0
    _
  %s8 = ssub.s32 1, %s6
  %s9 = scalar_select 0, %s8, %s6
  // Predicated region
  $region2: #{transformer_logs_forward.1} parent=0 // pred_check
    _
  $region3: #{transformer_logs_forward.1} parent=0 // pred_check_branch
    %11 = sbr.rel (0) target = $region5
  $region4: #{transformer_logs_forward.1} parent=0 // pred_region
    _
  $region5: #{transformer_logs_forward.1} parent=0 // pred_fallthru
    _
  // Predicated region
  $region6: #{transformer_logs_forward.1} parent=0 // pred_check
    _
  $region7: #{transformer_logs_forward.1} parent=0 // pred_check_branch
    %13 = sbr.rel (0) target = $region9
  $region8: #{transformer_logs_forward.1} parent=0 // pred_region
    _
  $region9: #{transformer_logs_forward.1} parent=0 // pred_fallthru
    _
  // Predicated region
  $region10: #{transformer_logs_forward.1} parent=0 // pred_check
    _
  $region11: #{transformer_logs_forward.1} parent=0 // pred_check_branch
    %15 = sbr.rel (0) target = $region13
  $region12: #{transformer_logs_forward.1} parent=0 // pred_region
    _
  $region13: #{transformer_logs_forward.1} parent=0 // pred_fallthru
    _
  // Predicated region
  $region14: #{transformer_logs_forward.1} parent=0 // pred_check
    _
  $region15: #{transformer_logs_forward.1} parent=0 // pred_check_branch
    %17 = sbr.rel (0) target = $region17
  $region16: #{transformer_logs_forward.1} parent=0 // pred_region
    _
  $region17: #{transformer_logs_forward.1} parent=0 // pred_fallthru
    _
  // Predicated region
  $region18: #{transformer_logs_forward.1} parent=0 // pred_check
    _
  $region19: #{transformer_logs_forward.1} parent=0 // pred_check_branch
    %19 = sbr.rel (0) target = $region21
  $region20: #{transformer_logs_forward.1} parent=0 // pred_region
    _
  $region21: #{transformer_logs_forward.1} parent=0 // pred_fallthru
    _
  %v20 = vld [vmem:[%s4] sm:$0xff]
  %v21 = vld [vmem:[%s4 + $0x8] sm:$0xff]
  %v22 = vld [vmem:[%s4 + $0x10] sm:$0xff]
  %v23 = vld [vmem:[%s0] sm:$0xff]
  %v24 = vadd.f32 %v23, %v20
  %v25 = vld [vmem:[%s1] sm:$0xff]
  %v26 = vld [vmem:[%s1 + $0x8] sm:$0xff]
  %v27 = vld [vmem:[%s1 + $0x10] sm:$0xff]
  %v28 = vld [vmem:[%s1 + $0x18] sm:$0xff]
  %v29 = vld [vmem:[%s1 + $0x20] sm:$0xff]
  %v30 = vld [vmem:[%s1 + $0x28] sm:$0xff]
  %v31 = vld [vmem:[%s1 + $0x30] sm:$0xff]
  %v32 = vld [vmem:[%s1 + $0x38] sm:$0xff]
  %vm33 = vcmask 261120
  %v35 = vsel %vm33, %v24, 0
  %37 = vmatpush.msra.mxu0 0.0
  %38 = vmatpush.msra.mxu0 0.0
  %39 = vmatpush.msra.mxu0 0.0
  %40 = vmatpush.msra.mxu0 0.0
  %41 = vmatpush.msra.mxu0 0.0
  %42 = vmatpush.msra.mxu0 0.0
  %43 = vmatpush.msra.mxu0 0.0
  %44 = vmatpush.msra.mxu0 0.0
  %45 = vmatpush.msra.mxu0 0.0
  %46 = vmatpush.msra.mxu0 0.0
  %47 = vmatpush.msra.mxu0 0.0
  %48 = vmatpush.msra.mxu0 0.0
  %49 = vmatpush.msra.mxu0 %v31
  %50 = vmatpush.msra.mxu0 %v29
  %51 = vmatpush.msra.mxu0 %v27
  %52 = vmatpush.msra.mxu0 %v25
  %53 = vmatmul.f32.gmra.mxu0 %v35
  %v54 = vpop.f32.mrf.mxu0
  %v55 = vadd.f32 0.0, %v54
  %56 = vdwg.mxu0
  %57 = vmatpush.msra.mxu0 0.0
  %58 = vmatpush.msra.mxu0 0.0
  %59 = vmatpush.msra.mxu0 0.0
  %60 = vmatpush.msra.mxu0 0.0
  %61 = vmatpush.msra.mxu0 0.0
  %62 = vmatpush.msra.mxu0 0.0
  %63 = vmatpush.msra.mxu0 0.0
  %64 = vmatpush.msra.mxu0 0.0
  %65 = vmatpush.msra.mxu0 0.0
  %66 = vmatpush.msra.mxu0 0.0
  %67 = vmatpush.msra.mxu0 0.0
  %68 = vmatpush.msra.mxu0 0.0
  %69 = vmatpush.msra.mxu0 %v32
  %70 = vmatpush.msra.mxu0 %v30
  %71 = vmatpush.msra.mxu0 %v28
  %72 = vmatpush.msra.mxu0 %v26
  %73 = vmatmul.f32.gmra.mxu0 %v35
  %v74 = vpop.f32.mrf.mxu0
  %v75 = vadd.f32 0.0, %v74
  %76 = vdwg.mxu0
  %78 = vrot.lane.b32.xlu0 %v55, 64
  %v79 = vpop.permute.xlu0 %78
  %v80 = vsel %vm33, %v55, 0
  %v82 = vsel %vm33, %v79, 0
  %84 = vmatpush.xpose.msra.mxu0 0.0
  %85 = vmatpush.xpose.msra.mxu0 0.0
  %86 = vmatpush.xpose.msra.mxu0 0.0
  %87 = vmatpush.xpose.msra.mxu0 0.0
  %88 = vmatpush.xpose.msra.mxu0 0.0
  %89 = vmatpush.xpose.msra.mxu0 0.0
  %90 = vmatpush.xpose.msra.mxu0 0.0
  %91 = vmatpush.xpose.msra.mxu0 0.0
  %92 = vmatpush.xpose.msra.mxu0 0.0
  %93 = vmatpush.xpose.msra.mxu0 0.0
  %94 = vmatpush.xpose.msra.mxu0 0.0
  %95 = vmatpush.xpose.msra.mxu0 0.0
  %96 = vmatpush.xpose.msra.mxu0 0.0
  %97 = vmatpush.xpose.msra.mxu0 0.0
  %98 = vmatpush.xpose.msra.mxu0 0.0
  %99 = vmatpush.xpose.msra.mxu0 %v82
  %100 = vmatmul.f32.gmra.mxu0 %v80
  %v101 = vpop.f32.mrf.mxu0
  %v102 = vadd.f32 0.0, %v101
  %103 = vdwg.mxu0
  %vm104 = vcmask 64512
  %v105 = vsel %vm104, %v102, -inf
  %106 = vmax.xlane.f32.xlu0 %v105
  %v107 = vpop.xlane.xlu0 %106
  %v108 = vsub.f32 %v102, %v107
  %v109 = vmul.f32 %v108, 1.442695
  %v110 = vpow.pop %v109
  %v111 = vsel %vm104, %v110, 0.0
  %112 = vadd.xlane.f32.xlu0 %v111
  %v113 = vpop.xlane.xlu0 %112
  %v114 = vrcp.pop %v113
  %v115 = vmul.f32 %v110, %v114
  %v117 = vsel %vm104, %v115, 0
  %119 = vmatpush.msra.mxu0 0.0
  %120 = vmatpush.msra.mxu0 0.0
  %121 = vmatpush.msra.mxu0 0.0
  %122 = vmatpush.msra.mxu0 0.0
  %123 = vmatpush.msra.mxu0 0.0
  %124 = vmatpush.msra.mxu0 0.0
  %125 = vmatpush.msra.mxu0 0.0
  %126 = vmatpush.msra.mxu0 0.0
  %127 = vmatpush.msra.mxu0 0.0
  %128 = vmatpush.msra.mxu0 0.0
  %129 = vmatpush.msra.mxu0 0.0
  %130 = vmatpush.msra.mxu0 0.0
  %131 = vmatpush.msra.mxu0 0.0
  %132 = vmatpush.msra.mxu0 0.0
  %133 = vmatpush.msra.mxu0 0.0
  %134 = vmatpush.msra.mxu0 %v75
  %135 = vmatmul.f32.gmra.mxu0 %v117
  %v136 = vpop.f32.mrf.mxu0
  %v137 = vadd.f32 0.0, %v136
  %138 = vdwg.mxu0
  %139 = vrot.lane.b32.xlu0 %v55, 96
  %v140 = vpop.permute.xlu0 %139
  %141 = vrot.lane.b32.xlu0 %v55, 32
  %v142 = vpop.permute.xlu0 %141
  %v143 = vsel %vm33, %v140, 0
  %v145 = vsel %vm33, %v142, 0
  %147 = vmatpush.xpose.msra.mxu0 0.0
  %148 = vmatpush.xpose.msra.mxu0 0.0
  %149 = vmatpush.xpose.msra.mxu0 0.0
  %150 = vmatpush.xpose.msra.mxu0 0.0
  %151 = vmatpush.xpose.msra.mxu0 0.0
  %152 = vmatpush.xpose.msra.mxu0 0.0
  %153 = vmatpush.xpose.msra.mxu0 0.0
  %154 = vmatpush.xpose.msra.mxu0 0.0
  %155 = vmatpush.xpose.msra.mxu0 0.0
  %156 = vmatpush.xpose.msra.mxu0 0.0
  %157 = vmatpush.xpose.msra.mxu0 0.0
  %158 = vmatpush.xpose.msra.mxu0 0.0
  %159 = vmatpush.xpose.msra.mxu0 0.0
  %160 = vmatpush.xpose.msra.mxu0 0.0
  %161 = vmatpush.xpose.msra.mxu0 0.0
  %162 = vmatpush.xpose.msra.mxu0 %v145
  %163 = vmatmul.f32.gmra.mxu0 %v143
  %v164 = vpop.f32.mrf.mxu0
  %v165 = vadd.f32 0.0, %v164
  %166 = vdwg.mxu0
  %v167 = vsel %vm104, %v165, -inf
  %168 = vmax.xlane.f32.xlu0 %v167
  %v169 = vpop.xlane.xlu0 %168
  %v170 = vsub.f32 %v165, %v169
  %v171 = vmul.f32 %v170, 1.442695
  %v172 = vpow.pop %v171
  %v173 = vsel %vm104, %v172, 0.0
  %174 = vadd.xlane.f32.xlu0 %v173
  %v175 = vpop.xlane.xlu0 %174
  %v176 = vrcp.pop %v175
  %v177 = vmul.f32 %v172, %v176
  %179 = vrot.lane.b32.xlu0 %v75, 96
  %v180 = vpop.permute.xlu0 %179
  %v183 = vsel %vm104, %v177, 0
  %185 = vmatpush.msra.mxu0 0.0
  %186 = vmatpush.msra.mxu0 0.0
  %187 = vmatpush.msra.mxu0 0.0
  %188 = vmatpush.msra.mxu0 0.0
  %189 = vmatpush.msra.mxu0 0.0
  %190 = vmatpush.msra.mxu0 0.0
  %191 = vmatpush.msra.mxu0 0.0
  %192 = vmatpush.msra.mxu0 0.0
  %193 = vmatpush.msra.mxu0 0.0
  %194 = vmatpush.msra.mxu0 0.0
  %195 = vmatpush.msra.mxu0 0.0
  %196 = vmatpush.msra.mxu0 0.0
  %197 = vmatpush.msra.mxu0 0.0
  %198 = vmatpush.msra.mxu0 0.0
  %199 = vmatpush.msra.mxu0 0.0
  %200 = vmatpush.msra.mxu0 %v180
  %201 = vmatmul.f32.gmra.mxu0 %v183
  %v202 = vpop.f32.mrf.mxu0
  %v203 = vadd.f32 0.0, %v202
  %204 = vdwg.mxu0
  %v205 = vld [vmem:[%s2] sm:$0xff]
  %v206 = vld [vmem:[%s2 + $0x8] sm:$0xff]
  %v207 = vld [vmem:[%s2 + $0x10] sm:$0xff]
  %v208 = vld [vmem:[%s2 + $0x18] sm:$0xff]
  %v209 = vld [vmem:[%s2 + $0x20] sm:$0xff]
  %v210 = vld [vmem:[%s2 + $0x28] sm:$0xff]
  %v211 = vld [vmem:[%s2 + $0x30] sm:$0xff]
  %v212 = vld [vmem:[%s2 + $0x38] sm:$0xff]
  %v213 = vld [vmem:[%s2 + $0x40] sm:$0xff]
  %v214 = vld [vmem:[%s2 + $0x48] sm:$0xff]
  %v215 = vld [vmem:[%s2 + $0x50] sm:$0xff]
  %v216 = vld [vmem:[%s2 + $0x58] sm:$0xff]
  %v217 = vld [vmem:[%s2 + $0x60] sm:$0xff]
  %v218 = vld [vmem:[%s2 + $0x68] sm:$0xff]
  %v219 = vld [vmem:[%s2 + $0x70] sm:$0xff]
  %v220 = vld [vmem:[%s2 + $0x78] sm:$0xff]
  %v221 = vld [vmem:[%s2 + $0x80] sm:$0xff]
  %v222 = vld [vmem:[%s2 + $0x88] sm:$0xff]
  %v223 = vld [vmem:[%s2 + $0x90] sm:$0xff]
  %v224 = vld [vmem:[%s2 + $0x98] sm:$0xff]
  %v225 = vld [vmem:[%s2 + $0xa0] sm:$0xff]
  %v226 = vld [vmem:[%s2 + $0xa8] sm:$0xff]
  %v227 = vld [vmem:[%s2 + $0xb0] sm:$0xff]
  %v228 = vld [vmem:[%s2 + $0xb8] sm:$0xff]
  %230 = vrot.lane.b32.xlu0 %v203, 32
  %v231 = vpop.permute.xlu0 %230
  %v233 = vsel %vm33, %v137, %v231
  %v234 = vperm.slane %v21, 0
  %vm235 = vcmask 523264
  %v237 = vsel %vm235, %v233, 0
  %239 = vmatpush.msra.mxu0 0.0
  %240 = vmatpush.msra.mxu0 0.0
  %241 = vmatpush.msra.mxu0 0.0
  %242 = vmatpush.msra.mxu0 0.0
  %243 = vmatpush.msra.mxu0 0.0
  %244 = vmatpush.msra.mxu0 0.0
  %245 = vmatpush.msra.mxu0 0.0
  %246 = vmatpush.msra.mxu0 0.0
  %247 = vmatpush.msra.mxu0 %v212
  %248 = vmatpush.msra.mxu0 %v211
  %249 = vmatpush.msra.mxu0 %v210
  %250 = vmatpush.msra.mxu0 %v209
  %251 = vmatpush.msra.mxu0 %v208
  %252 = vmatpush.msra.mxu0 %v207
  %253 = vmatpush.msra.mxu0 %v206
  %254 = vmatpush.msra.mxu0 %v205
  %255 = vmatmul.f32.gmra.mxu0 %v237
  %v256 = vpop.f32.mrf.mxu0
  %v257 = vadd.f32 %v234, %v256
  %258 = vdwg.mxu0
  %v259 = vadd.f32 %v257, %v24
  %v260 = vsel %vm33, %v259, 0.0
  %261 = vadd.xlane.f32.xlu0 %v260
  %v262 = vpop.xlane.xlu0 %261
  %v263 = vrcp.pop 32.0
  %v264 = vmul.f32 32.0, %v263
  %v265 = vsub.f32 1.0, %v264
  %v266 = vmul.f32 %v263, %v265
  %v267 = vadd.f32 %v263, %v266
  %vm268 = vweird.f32 %v263
  %v269 = vsel %vm268, %v263, %v267
  %v270 = vmul.f32 %v262, %v269
  %v271 = vmul.f32 %v259, %v259
  %v272 = vsel %vm33, %v271, 0.0
  %273 = vadd.xlane.f32.xlu0 %v272
  %v274 = vpop.xlane.xlu0 %273
  %v275 = vmul.f32 %v274, %v269
  %v276 = vmul.f32 %v270, %v270
  %v277 = vsub.f32 %v275, %v276
  %v278 = vsub.f32 %v259, %v270
  %v279 = vadd.f32 %v277, 1e-05
  %v280 = vrsqrt.pop %v279
  %v281 = vmul.f32 %v280, %v279
  %v282 = vmul.f32 %v281, %v280
  %v283 = vmul.f32 0.5, %v282
  %v284 = vsub.f32 1.5, %v283
  %v285 = vmul.f32 %v280, %v284
  %vm286 = vweird.f32 %v279
  %vm287 = vweird.f32 %v280
  %vm288 = vmor %vm286, %vm287
  %v289 = vsel %vm288, %v280, %v285
  %v290 = vmul.f32 %v278, %v289
  %v291 = vperm.slane %v21, 1
  %v292 = vmul.f32 %v290, %v291
  %v293 = vperm.slane %v21, 2
  %v294 = vadd.f32 %v292, %v293
  %v295 = vld [vmem:[%s3] sm:$0xff]
  %v296 = vld [vmem:[%s3 + $0x8] sm:$0xff]
  %v297 = vld [vmem:[%s3 + $0x10] sm:$0xff]
  %v298 = vld [vmem:[%s3 + $0x18] sm:$0xff]
  %v299 = vperm.slane %v21, 3
  %v301 = vsel %vm33, %v294, 0
  %303 = vmatpush.msra.mxu0 0.0
  %304 = vmatpush.msra.mxu0 0.0
  %305 = vmatpush.msra.mxu0 0.0
  %306 = vmatpush.msra.mxu0 0.0
  %307 = vmatpush.msra.mxu0 0.0
  %308 = vmatpush.msra.mxu0 0.0
  %309 = vmatpush.msra.mxu0 0.0
  %310 = vmatpush.msra.mxu0 0.0
  %311 = vmatpush.msra.mxu0 0.0
  %312 = vmatpush.msra.mxu0 0.0
  %313 = vmatpush.msra.mxu0 0.0
  %314 = vmatpush.msra.mxu0 0.0
  %315 = vmatpush.msra.mxu0 %v298
  %316 = vmatpush.msra.mxu0 %v297
  %317 = vmatpush.msra.mxu0 %v296
  %318 = vmatpush.msra.mxu0 %v295
  %319 = vmatmul.f32.gmra.mxu0 %v301
  %v320 = vpop.f32.mrf.mxu0
  %v321 = vadd.f32 %v299, %v320
  %322 = vdwg.mxu0
  %v323 = vmax.f32 %v321, 0.0
  %v324 = vperm.slane %v21, 4
  %325 = vmatpush.msra.mxu0 %v228
  %326 = vmatpush.msra.mxu0 %v227
  %327 = vmatpush.msra.mxu0 %v226
  %328 = vmatpush.msra.mxu0 %v225
  %329 = vmatpush.msra.mxu0 %v224
  %330 = vmatpush.msra.mxu0 %v223
  %331 = vmatpush.msra.mxu0 %v222
  %332 = vmatpush.msra.mxu0 %v221
  %333 = vmatpush.msra.mxu0 %v220
  %334 = vmatpush.msra.mxu0 %v219
  %335 = vmatpush.msra.mxu0 %v218
  %336 = vmatpush.msra.mxu0 %v217
  %337 = vmatpush.msra.mxu0 %v216
  %338 = vmatpush.msra.mxu0 %v215
  %339 = vmatpush.msra.mxu0 %v214
  %340 = vmatpush.msra.mxu0 %v213
  %341 = vmatmul.f32.gmra.mxu0 %v323
  %v342 = vpop.f32.mrf.mxu0
  %v343 = vadd.f32 %v324, %v342
  %344 = vdwg.mxu0
  %v345 = vadd.f32 %v343, %v294
  %v346 = vsel %vm33, %v345, 0.0
  %347 = vadd.xlane.f32.xlu0 %v346
  %v348 = vpop.xlane.xlu0 %347
  %v349 = vmul.f32 %v348, %v269
  %v350 = vmul.f32 %v345, %v345
  %v351 = vsel %vm33, %v350, 0.0
  %352 = vadd.xlane.f32.xlu0 %v351
  %v353 = vpop.xlane.xlu0 %352
  %v354 = vmul.f32 %v353, %v269
  %v355 = vmul.f32 %v349, %v349
  %v356 = vsub.f32 %v354, %v355
  %v357 = vsub.f32 %v345, %v349
  %v358 = vadd.f32 %v356, 1e-05
  %v359 = vrsqrt.pop %v358
  %v360 = vmul.f32 %v359, %v358
  %v361 = vmul.f32 %v360, %v359
  %v362 = vmul.f32 0.5, %v361
  %v363 = vsub.f32 1.5, %v362
  %v364 = vmul.f32 %v359, %v363
  %vm365 = vweird.f32 %v358
  %vm366 = vweird.f32 %v359
  %vm367 = vmor %vm365, %vm366
  %v368 = vsel %vm367, %v359, %v364
  %v369 = vmul.f32 %v357, %v368
  %v370 = vperm.slane %v21, 5
  %v371 = vmul.f32 %v369, %v370
  %v372 = vperm.slane %v21, 6
  %v373 = vadd.f32 %v371, %v372
  %s374 = scalar_lea.vmem %s1, 64
  %v375 = vld [vmem:[%s374] sm:$0xff]
  %v376 = vld [vmem:[%s374 + $0x8] sm:$0xff]
  %v377 = vld [vmem:[%s374 + $0x10] sm:$0xff]
  %v378 = vld [vmem:[%s374 + $0x18] sm:$0xff]
  %v379 = vld [vmem:[%s374 + $0x20] sm:$0xff]
  %v380 = vld [vmem:[%s374 + $0x28] sm:$0xff]
  %v381 = vld [vmem:[%s374 + $0x30] sm:$0xff]
  %v382 = vld [vmem:[%s374 + $0x38] sm:$0xff]
  %v384 = vsel %vm33, %v373, 0
  %386 = vmatpush.msra.mxu0 0.0
  %387 = vmatpush.msra.mxu0 0.0
  %388 = vmatpush.msra.mxu0 0.0
  %389 = vmatpush.msra.mxu0 0.0
  %390 = vmatpush.msra.mxu0 0.0
  %391 = vmatpush.msra.mxu0 0.0
  %392 = vmatpush.msra.mxu0 0.0
  %393 = vmatpush.msra.mxu0 0.0
  %394 = vmatpush.msra.mxu0 0.0
  %395 = vmatpush.msra.mxu0 0.0
  %396 = vmatpush.msra.mxu0 0.0
  %397 = vmatpush.msra.mxu0 0.0
  %398 = vmatpush.msra.mxu0 %v381
  %399 = vmatpush.msra.mxu0 %v379
  %400 = vmatpush.msra.mxu0 %v377
  %401 = vmatpush.msra.mxu0 %v375
  %402 = vmatmul.f32.gmra.mxu0 %v384
  %v403 = vpop.f32.mrf.mxu0
  %v404 = vadd.f32 0.0, %v403
  %405 = vdwg.mxu0
  %406 = vmatpush.msra.mxu0 0.0
  %407 = vmatpush.msra.mxu0 0.0
  %408 = vmatpush.msra.mxu0 0.0
  %409 = vmatpush.msra.mxu0 0.0
  %410 = vmatpush.msra.mxu0 0.0
  %411 = vmatpush.msra.mxu0 0.0
  %412 = vmatpush.msra.mxu0 0.0
  %413 = vmatpush.msra.mxu0 0.0
  %414 = vmatpush.msra.mxu0 0.0
  %415 = vmatpush.msra.mxu0 0.0
  %416 = vmatpush.msra.mxu0 0.0
  %417 = vmatpush.msra.mxu0 0.0
  %418 = vmatpush.msra.mxu0 %v382
  %419 = vmatpush.msra.mxu0 %v380
  %420 = vmatpush.msra.mxu0 %v378
  %421 = vmatpush.msra.mxu0 %v376
  %422 = vmatmul.f32.gmra.mxu0 %v384
  %v423 = vpop.f32.mrf.mxu0
  %v424 = vadd.f32 0.0, %v423
  %425 = vdwg.mxu0
  %427 = vrot.lane.b32.xlu0 %v404, 64
  %v428 = vpop.permute.xlu0 %427
  %v429 = vsel %vm33, %v404, 0
  %v431 = vsel %vm33, %v428, 0
  %433 = vmatpush.xpose.msra.mxu0 0.0
  %434 = vmatpush.xpose.msra.mxu0 0.0
  %435 = vmatpush.xpose.msra.mxu0 0.0
  %436 = vmatpush.xpose.msra.mxu0 0.0
  %437 = vmatpush.xpose.msra.mxu0 0.0
  %438 = vmatpush.xpose.msra.mxu0 0.0
  %439 = vmatpush.xpose.msra.mxu0 0.0
  %440 = vmatpush.xpose.msra.mxu0 0.0
  %441 = vmatpush.xpose.msra.mxu0 0.0
  %442 = vmatpush.xpose.msra.mxu0 0.0
  %443 = vmatpush.xpose.msra.mxu0 0.0
  %444 = vmatpush.xpose.msra.mxu0 0.0
  %445 = vmatpush.xpose.msra.mxu0 0.0
  %446 = vmatpush.xpose.msra.mxu0 0.0
  %447 = vmatpush.xpose.msra.mxu0 0.0
  %448 = vmatpush.xpose.msra.mxu0 %v431
  %449 = vmatmul.f32.gmra.mxu0 %v429
  %v450 = vpop.f32.mrf.mxu0
  %v451 = vadd.f32 0.0, %v450
  %452 = vdwg.mxu0
  %v453 = vsel %vm104, %v451, -inf
  %454 = vmax.xlane.f32.xlu0 %v453
  %v455 = vpop.xlane.xlu0 %454
  %v456 = vsub.f32 %v451, %v455
  %v457 = vmul.f32 %v456, 1.442695
  %v458 = vpow.pop %v457
  %v459 = vsel %vm104, %v458, 0.0
  %460 = vadd.xlane.f32.xlu0 %v459
  %v461 = vpop.xlane.xlu0 %460
  %v462 = vrcp.pop %v461
  %v463 = vmul.f32 %v458, %v462
  %v465 = vsel %vm104, %v463, 0
  %467 = vmatpush.msra.mxu0 0.0
  %468 = vmatpush.msra.mxu0 0.0
  %469 = vmatpush.msra.mxu0 0.0
  %470 = vmatpush.msra.mxu0 0.0
  %471 = vmatpush.msra.mxu0 0.0
  %472 = vmatpush.msra.mxu0 0.0
  %473 = vmatpush.msra.mxu0 0.0
  %474 = vmatpush.msra.mxu0 0.0
  %475 = vmatpush.msra.mxu0 0.0
  %476 = vmatpush.msra.mxu0 0.0
  %477 = vmatpush.msra.mxu0 0.0
  %478 = vmatpush.msra.mxu0 0.0
  %479 = vmatpush.msra.mxu0 0.0
  %480 = vmatpush.msra.mxu0 0.0
  %481 = vmatpush.msra.mxu0 0.0
  %482 = vmatpush.msra.mxu0 %v424
  %483 = vmatmul.f32.gmra.mxu0 %v465
  %v484 = vpop.f32.mrf.mxu0
  %v485 = vadd.f32 0.0, %v484
  %486 = vdwg.mxu0
  %487 = vrot.lane.b32.xlu0 %v404, 96
  %v488 = vpop.permute.xlu0 %487
  %489 = vrot.lane.b32.xlu0 %v404, 32
  %v490 = vpop.permute.xlu0 %489
  %v491 = vsel %vm33, %v488, 0
  %v493 = vsel %vm33, %v490, 0
  %495 = vmatpush.xpose.msra.mxu0 0.0
  %496 = vmatpush.xpose.msra.mxu0 0.0
  %497 = vmatpush.xpose.msra.mxu0 0.0
  %498 = vmatpush.xpose.msra.mxu0 0.0
  %499 = vmatpush.xpose.msra.mxu0 0.0
  %500 = vmatpush.xpose.msra.mxu0 0.0
  %501 = vmatpush.xpose.msra.mxu0 0.0
  %502 = vmatpush.xpose.msra.mxu0 0.0
  %503 = vmatpush.xpose.msra.mxu0 0.0
  %504 = vmatpush.xpose.msra.mxu0 0.0
  %505 = vmatpush.xpose.msra.mxu0 0.0
  %506 = vmatpush.xpose.msra.mxu0 0.0
  %507 = vmatpush.xpose.msra.mxu0 0.0
  %508 = vmatpush.xpose.msra.mxu0 0.0
  %509 = vmatpush.xpose.msra.mxu0 0.0
  %510 = vmatpush.xpose.msra.mxu0 %v493
  %511 = vmatmul.f32.gmra.mxu0 %v491
  %v512 = vpop.f32.mrf.mxu0
  %v513 = vadd.f32 0.0, %v512
  %514 = vdwg.mxu0
  %v515 = vsel %vm104, %v513, -inf
  %516 = vmax.xlane.f32.xlu0 %v515
  %v517 = vpop.xlane.xlu0 %516
  %v518 = vsub.f32 %v513, %v517
  %v519 = vmul.f32 %v518, 1.442695
  %v520 = vpow.pop %v519
  %v521 = vsel %vm104, %v520, 0.0
  %522 = vadd.xlane.f32.xlu0 %v521
  %v523 = vpop.xlane.xlu0 %522
  %v524 = vrcp.pop %v523
  %v525 = vmul.f32 %v520, %v524
  %527 = vrot.lane.b32.xlu0 %v424, 96
  %v528 = vpop.permute.xlu0 %527
  %v531 = vsel %vm104, %v525, 0
  %533 = vmatpush.msra.mxu0 0.0
  %534 = vmatpush.msra.mxu0 0.0
  %535 = vmatpush.msra.mxu0 0.0
  %536 = vmatpush.msra.mxu0 0.0
  %537 = vmatpush.msra.mxu0 0.0
  %538 = vmatpush.msra.mxu0 0.0
  %539 = vmatpush.msra.mxu0 0.0
  %540 = vmatpush.msra.mxu0 0.0
  %541 = vmatpush.msra.mxu0 0.0
  %542 = vmatpush.msra.mxu0 0.0
  %543 = vmatpush.msra.mxu0 0.0
  %544 = vmatpush.msra.mxu0 0.0
  %545 = vmatpush.msra.mxu0 0.0
  %546 = vmatpush.msra.mxu0 0.0
  %547 = vmatpush.msra.mxu0 0.0
  %548 = vmatpush.msra.mxu0 %v528
  %549 = vmatmul.f32.gmra.mxu0 %v531
  %v550 = vpop.f32.mrf.mxu0
  %v551 = vadd.f32 0.0, %v550
  %552 = vdwg.mxu0
  %s553 = scalar_lea.vmem %s2, 192
  %v554 = vld [vmem:[%s553] sm:$0xff]
  %v555 = vld [vmem:[%s553 + $0x8] sm:$0xff]
  %v556 = vld [vmem:[%s553 + $0x10] sm:$0xff]
  %v557 = vld [vmem:[%s553 + $0x18] sm:$0xff]
  %v558 = vld [vmem:[%s553 + $0x20] sm:$0xff]
  %v559 = vld [vmem:[%s553 + $0x28] sm:$0xff]
  %v560 = vld [vmem:[%s553 + $0x30] sm:$0xff]
  %v561 = vld [vmem:[%s553 + $0x38] sm:$0xff]
  %v562 = vld [vmem:[%s553 + $0x40] sm:$0xff]
  %v563 = vld [vmem:[%s553 + $0x48] sm:$0xff]
  %v564 = vld [vmem:[%s553 + $0x50] sm:$0xff]
  %v565 = vld [vmem:[%s553 + $0x58] sm:$0xff]
  %v566 = vld [vmem:[%s553 + $0x60] sm:$0xff]
  %v567 = vld [vmem:[%s553 + $0x68] sm:$0xff]
  %v568 = vld [vmem:[%s553 + $0x70] sm:$0xff]
  %v569 = vld [vmem:[%s553 + $0x78] sm:$0xff]
  %v570 = vld [vmem:[%s553 + $0x80] sm:$0xff]
  %v571 = vld [vmem:[%s553 + $0x88] sm:$0xff]
  %v572 = vld [vmem:[%s553 + $0x90] sm:$0xff]
  %v573 = vld [vmem:[%s553 + $0x98] sm:$0xff]
  %v574 = vld [vmem:[%s553 + $0xa0] sm:$0xff]
  %v575 = vld [vmem:[%s553 + $0xa8] sm:$0xff]
  %v576 = vld [vmem:[%s553 + $0xb0] sm:$0xff]
  %v577 = vld [vmem:[%s553 + $0xb8] sm:$0xff]
  %579 = vrot.lane.b32.xlu0 %v551, 32
  %v580 = vpop.permute.xlu0 %579
  %v582 = vsel %vm33, %v485, %v580
  %v583 = vperm.slane %v21, 7
  %v585 = vsel %vm235, %v582, 0
  %587 = vmatpush.msra.mxu0 0.0
  %588 = vmatpush.msra.mxu0 0.0
  %589 = vmatpush.msra.mxu0 0.0
  %590 = vmatpush.msra.mxu0 0.0
  %591 = vmatpush.msra.mxu0 0.0
  %592 = vmatpush.msra.mxu0 0.0
  %593 = vmatpush.msra.mxu0 0.0
  %594 = vmatpush.msra.mxu0 0.0
  %595 = vmatpush.msra.mxu0 %v561
  %596 = vmatpush.msra.mxu0 %v560
  %597 = vmatpush.msra.mxu0 %v559
  %598 = vmatpush.msra.mxu0 %v558
  %599 = vmatpush.msra.mxu0 %v557
  %600 = vmatpush.msra.mxu0 %v556
  %601 = vmatpush.msra.mxu0 %v555
  %602 = vmatpush.msra.mxu0 %v554
  %603 = vmatmul.f32.gmra.mxu0 %v585
  %v604 = vpop.f32.mrf.mxu0
  %v605 = vadd.f32 %v583, %v604
  %606 = vdwg.mxu0
  %v607 = vadd.f32 %v605, %v373
  %v608 = vsel %vm33, %v607, 0.0
  %609 = vadd.xlane.f32.xlu0 %v608
  %v610 = vpop.xlane.xlu0 %609
  %v611 = vmul.f32 %v610, %v269
  %v612 = vmul.f32 %v607, %v607
  %v613 = vsel %vm33, %v612, 0.0
  %614 = vadd.xlane.f32.xlu0 %v613
  %v615 = vpop.xlane.xlu0 %614
  %v616 = vmul.f32 %v615, %v269
  %v617 = vmul.f32 %v611, %v611
  %v618 = vsub.f32 %v616, %v617
  %v619 = vsub.f32 %v607, %v611
  %v620 = vadd.f32 %v618, 1e-05
  %v621 = vrsqrt.pop %v620
  %v622 = vmul.f32 %v621, %v620
  %v623 = vmul.f32 %v622, %v621
  %v624 = vmul.f32 0.5, %v623
  %v625 = vsub.f32 1.5, %v624
  %v626 = vmul.f32 %v621, %v625
  %vm627 = vweird.f32 %v620
  %vm628 = vweird.f32 %v621
  %vm629 = vmor %vm627, %vm628
  %v630 = vsel %vm629, %v621, %v626
  %v631 = vmul.f32 %v619, %v630
  %v632 = vperm.slane %v22, 0
  %v633 = vmul.f32 %v631, %v632
  %v634 = vperm.slane %v22, 1
  %v635 = vadd.f32 %v633, %v634
  %s636 = scalar_lea.vmem %s3, 32
  %v637 = vld [vmem:[%s636] sm:$0xff]
  %v638 = vld [vmem:[%s636 + $0x8] sm:$0xff]
  %v639 = vld [vmem:[%s636 + $0x10] sm:$0xff]
  %v640 = vld [vmem:[%s636 + $0x18] sm:$0xff]
  %v641 = vperm.slane %v22, 2
  %v643 = vsel %vm33, %v635, 0
  %645 = vmatpush.msra.mxu0 0.0
  %646 = vmatpush.msra.mxu0 0.0
  %647 = vmatpush.msra.mxu0 0.0
  %648 = vmatpush.msra.mxu0 0.0
  %649 = vmatpush.msra.mxu0 0.0
  %650 = vmatpush.msra.mxu0 0.0
  %651 = vmatpush.msra.mxu0 0.0
  %652 = vmatpush.msra.mxu0 0.0
  %653 = vmatpush.msra.mxu0 0.0
  %654 = vmatpush.msra.mxu0 0.0
  %655 = vmatpush.msra.mxu0 0.0
  %656 = vmatpush.msra.mxu0 0.0
  %657 = vmatpush.msra.mxu0 %v640
  %658 = vmatpush.msra.mxu0 %v639
  %659 = vmatpush.msra.mxu0 %v638
  %660 = vmatpush.msra.mxu0 %v637
  %661 = vmatmul.f32.gmra.mxu0 %v643
  %v662 = vpop.f32.mrf.mxu0
  %v663 = vadd.f32 %v641, %v662
  %664 = vdwg.mxu0
  %v665 = vmax.f32 %v663, 0.0
  %v666 = vperm.slane %v22, 3
  %667 = vmatpush.msra.mxu0 %v577
  %668 = vmatpush.msra.mxu0 %v576
  %669 = vmatpush.msra.mxu0 %v575
  %670 = vmatpush.msra.mxu0 %v574
  %671 = vmatpush.msra.mxu0 %v573
  %672 = vmatpush.msra.mxu0 %v572
  %673 = vmatpush.msra.mxu0 %v571
  %674 = vmatpush.msra.mxu0 %v570
  %675 = vmatpush.msra.mxu0 %v569
  %676 = vmatpush.msra.mxu0 %v568
  %677 = vmatpush.msra.mxu0 %v567
  %678 = vmatpush.msra.mxu0 %v566
  %679 = vmatpush.msra.mxu0 %v565
  %680 = vmatpush.msra.mxu0 %v564
  %681 = vmatpush.msra.mxu0 %v563
  %682 = vmatpush.msra.mxu0 %v562
  %683 = vmatmul.f32.gmra.mxu0 %v665
  %v684 = vpop.f32.mrf.mxu0
  %v685 = vadd.f32 %v666, %v684
  %686 = vdwg.mxu0
  %v687 = vadd.f32 %v685, %v635
  %v688 = vsel %vm33, %v687, 0.0
  %689 = vadd.xlane.f32.xlu0 %v688
  %v690 = vpop.xlane.xlu0 %689
  %v691 = vmul.f32 %v690, %v269
  %v692 = vmul.f32 %v687, %v687
  %v693 = vsel %vm33, %v692, 0.0
  %694 = vadd.xlane.f32.xlu0 %v693
  %v695 = vpop.xlane.xlu0 %694
  %v696 = vmul.f32 %v695, %v269
  %v697 = vmul.f32 %v691, %v691
  %v698 = vsub.f32 %v696, %v697
  %v699 = vsub.f32 %v687, %v691
  %v700 = vadd.f32 %v698, 1e-05
  %v701 = vrsqrt.pop %v700
  %v702 = vmul.f32 %v701, %v700
  %v703 = vmul.f32 %v702, %v701
  %v704 = vmul.f32 0.5, %v703
  %v705 = vsub.f32 1.5, %v704
  %v706 = vmul.f32 %v701, %v705
  %vm707 = vweird.f32 %v700
  %vm708 = vweird.f32 %v701
  %vm709 = vmor %vm707, %vm708
  %v710 = vsel %vm709, %v701, %v706
  %v711 = vmul.f32 %v699, %v710
  %v712 = vperm.slane %v22, 4
  %v713 = vmul.f32 %v711, %v712
  %v714 = vperm.slane %v22, 5
  %v715 = vadd.f32 %v713, %v714
  %v716 = vsel %vm33, %v715, -inf
  %v717 = vrot.slane %v716, 4
  %v718 = vmax.f32 %v716, %v717
  %v719 = vrot.slane %v718, 2
  %v720 = vmax.f32 %v718, %v719
  %v721 = vrot.slane %v720, 1
  %v722 = vmax.f32 %v720, %v721
  %s723 = scalar_lea.vmem %s3, 64
  %v724 = vld [vmem:[%s723] sm:$0xff]
  %v725 = vld [vmem:[%s723 + $0x8] sm:$0xff]
  %v726 = vld [vmem:[%s723 + $0x10] sm:$0xff]
  %v727 = vld [vmem:[%s723 + $0x18] sm:$0xff]
  %v729 = vrot.slane %v22, 6
  %v732 = vsel %vm33, %v722, 0
  %734 = vmatpush.msra.mxu0 0.0
  %735 = vmatpush.msra.mxu0 0.0
  %736 = vmatpush.msra.mxu0 0.0
  %737 = vmatpush.msra.mxu0 0.0
  %738 = vmatpush.msra.mxu0 0.0
  %739 = vmatpush.msra.mxu0 0.0
  %740 = vmatpush.msra.mxu0 0.0
  %741 = vmatpush.msra.mxu0 0.0
  %742 = vmatpush.msra.mxu0 0.0
  %743 = vmatpush.msra.mxu0 0.0
  %744 = vmatpush.msra.mxu0 0.0
  %745 = vmatpush.msra.mxu0 0.0
  %746 = vmatpush.msra.mxu0 %v727
  %747 = vmatpush.msra.mxu0 %v726
  %748 = vmatpush.msra.mxu0 %v725
  %749 = vmatpush.msra.mxu0 %v724
  %750 = vmatmul.f32.gmra.mxu0 %v732
  %v751 = vpop.f32.mrf.mxu0
  %v752 = vadd.f32 %v729, %v751
  %753 = vdwg.mxu0
  %v754 = vperm.slane %v752, 0
  %755 = vst [vmem:[%s5] sm:$0xff] %v754
  // Predicated region
  $region22: #{transformer_logs_forward.1} parent=0 // pred_check
    _
  $region23: #{transformer_logs_forward.1} parent=0 // pred_check_branch
    %757 = sbr.rel (0) target = $region25
  $region24: #{transformer_logs_forward.1} parent=0 // pred_region
    _
  $region25: #{transformer_logs_forward.1} parent=0 // pred_fallthru
    _
  // Predicated region
  $region26: #{transformer_logs_forward.1} parent=0 // pred_check
    _
  $region27: #{transformer_logs_forward.1} parent=0 // pred_check_branch
    %759 = sbr.rel (0) target = $region29
  $region28: #{transformer_logs_forward.1} parent=0 // pred_region
    _
  $region29: #{transformer_logs_forward.1} parent=0 // pred_fallthru
    _

</llo_original>
